<compile_context>
chip_gen: v7x
topology: tpu7x:2x2x1
jax: 0.10.0
libtpu: 0.0.40
codegen_flags: <defaults>
</compile_context>

<pallas_src>
import jax
import jax.numpy as jnp
from jax import lax
from jax.experimental import pallas as pl
from jax.experimental.pallas import tpu as pltpu

# Pendulum-v1 dimensions (from the module's __init__ / env spaces)
STATE_DIM = 3
ACTION_DIM = 1
HIDDEN_DIM = 64


def _round_up(n, m):
    return ((n + m - 1) // m) * m


def _qvalue_kernel(x_ref, a_ref, w1x_ref, w1a_ref, b1_ref, w2_ref, b2_ref,
                   w3_ref, b3_ref, out_ref):
    """One batch tile: q = fc_out(relu(fc2(relu(fc1([x, a])))))."""
    x = x_ref[...]                                   # (TB, S) f32
    a = a_ref[...]                                   # (TB, A) f32

    # fc1: contraction dim is tiny (S+A = 4) -> VPU broadcast FMAs instead of
    # an almost-empty MXU matmul; also fuses the [x, a] concat.
    h1 = b1_ref[...] + x[:, 0:1] * w1x_ref[0:1, :]   # (TB, H)
    for k in range(1, x_ref.shape[1]):
        h1 = h1 + x[:, k:k + 1] * w1x_ref[k:k + 1, :]
    for k in range(a_ref.shape[1]):
        h1 = h1 + a[:, k:k + 1] * w1a_ref[k:k + 1, :]
    h1 = jnp.maximum(h1, 0.0)

    # fc2: 64x64 -> MXU.
    h2 = jnp.dot(h1, w2_ref[...], preferred_element_type=jnp.float32)
    h2 = jnp.maximum(h2 + b2_ref[...], 0.0)          # (TB, H)

    # fc_out: contract w3 (1, H) with h2 (TB, H) over the feature axis so the
    # result is a lane-dense (1, TB) row (batch on lanes) rather than a
    # 1-lane-wide (TB, 1) column.
    q_row = lax.dot_general(w3_ref[...], h2,
                            dimension_numbers=(((1,), (1,)), ((), ())),
                            preferred_element_type=jnp.float32)   # (1, TB)
    q_row = q_row + b3_ref[0]                        # scalar bias from SMEM
    out_ref[...] = q_row.reshape(out_ref.shape)      # (1, 1, TB) lane-dense


def qvalue_forward(x, a, params, *, block_batch=1024):
    """x: (B, state_dim), a: (B, action_dim) -> (B, 1) float32."""
    w1x, w1a, b1, w2, b2, w3, b3 = params
    x = x.astype(jnp.float32)
    a = a.astype(jnp.float32)

    batch = x.shape[0]
    s_dim = x.shape[1]
    a_dim = a.shape[1]
    hidden = w2.shape[0]

    # Batch tile: multiple of 8 sublanes; large enough to amortize per-step
    # overhead, small enough to keep double-buffered tiles far under VMEM.
    tb = min(block_batch, _round_up(batch, 8))
    num_tiles = pl.cdiv(batch, tb)
    padded = num_tiles * tb

    # Pad the batch so every grid step is a full, aligned tile (padded rows
    # are computed and discarded by the final slice).
    if padded != batch:
        x = jnp.pad(x, ((0, padded - batch), (0, 0)))
        a = jnp.pad(a, ((0, padded - batch), (0, 0)))

    flops = 2 * padded * ((s_dim + a_dim) * hidden + hidden * hidden + hidden)
    param_bytes = 4 * sum(int(p.size) for p in params)
    bytes_accessed = 4 * padded * (s_dim + a_dim + 1) + param_bytes

    out = pl.pallas_call(
        _qvalue_kernel,
        grid=(num_tiles,),
        in_specs=[
            pl.BlockSpec((tb, s_dim), lambda i: (i, 0)),        # x tile
            pl.BlockSpec((tb, a_dim), lambda i: (i, 0)),        # a tile
            pl.BlockSpec((s_dim, hidden), lambda i: (0, 0)),    # w1x (resident)
            pl.BlockSpec((a_dim, hidden), lambda i: (0, 0)),    # w1a (resident)
            pl.BlockSpec((1, hidden), lambda i: (0, 0)),        # b1
            pl.BlockSpec((hidden, hidden), lambda i: (0, 0)),   # w2
            pl.BlockSpec((1, hidden), lambda i: (0, 0)),        # b2
            pl.BlockSpec((1, hidden), lambda i: (0, 0)),        # w3 (out, in)
            pl.BlockSpec(memory_space=pltpu.MemorySpace.SMEM),  # b3 scalar
        ],
        out_specs=pl.BlockSpec((1, 1, tb), lambda i: (i, 0, 0)),
        out_shape=jax.ShapeDtypeStruct((num_tiles, 1, tb), jnp.float32),
        compiler_params=pltpu.CompilerParams(
            dimension_semantics=("parallel",),          # megacore on v7x
            vmem_limit_bytes=32 * 1024 * 1024),
        cost_estimate=pl.CostEstimate(flops=flops, transcendentals=0,
                                      bytes_accessed=bytes_accessed),
    )(x, a, w1x, w1a, b1, w2, b2, w3, b3)

    # (num_tiles, 1, tb) -> (B, 1); contiguous reshape, then drop padded rows.
    return out.reshape(padded)[:batch].reshape(batch, 1)


def init_params(key, state_dim=STATE_DIM, hidden_dim=HIDDEN_DIM,
                action_dim=ACTION_DIM):
    """torch.nn.Linear-style U[-1/sqrt(fan_in), +1/sqrt(fan_in)] init.

    Stored kernel-ready:
      w1x (S, H), w1a (A, H) : fc1 weight, pre-transposed (in, out) and split
                               so the kernel never needs the [x, a] concat
      w2 (H, H)              : pre-transposed (in, out)
      w3 (1, H)              : fc_out weight in torch's (out, in) layout,
                               contracted over H inside the kernel
      b1, b2 (1, H), b3 (1,)
    """
    ks = jax.random.split(key, 6)

    def uniform(k, shape, fan_in):
        bound = 1.0 / float(fan_in) ** 0.5
        return jax.random.uniform(k, shape, jnp.float32, -bound, bound)

    w1 = uniform(ks[0], (state_dim + action_dim, hidden_dim),
                 state_dim + action_dim)
    b1 = uniform(ks[1], (1, hidden_dim), state_dim + action_dim)
    w2 = uniform(ks[2], (hidden_dim, hidden_dim), hidden_dim)
    b2 = uniform(ks[3], (1, hidden_dim), hidden_dim)
    w3 = uniform(ks[4], (1, hidden_dim), hidden_dim)          # (out=1, in=H)
    b3 = uniform(ks[5], (1,), hidden_dim)
    w1x, w1a = w1[:state_dim], w1[state_dim:]
    return (w1x, w1a, b1, w2, b2, w3, b3)


def qvalue_ref(x, a, params):
    """Pure-JAX reference for verification (== PyTorch forward)."""
    w1x, w1a, b1, w2, b2, w3, b3 = params
    x = x.astype(jnp.float32)
    a = a.astype(jnp.float32)
    h1 = jnp.maximum(x @ w1x + a @ w1a + b1, 0.0)   # == relu(cat(x,a) @ w1 + b1)
    h2 = jnp.maximum(h1 @ w2 + b2, 0.0)
    return h2 @ w3.T + b3[None, :]


if __name__ == "__main__":
    key = jax.random.PRNGKey(0)
    k_params, k_x, k_a = jax.random.split(key, 3)

    params = init_params(k_params)

    # Main check: one full 256-row tile (lane-dense 256-wide output store).
    batch = 256
    x = jax.random.normal(k_x, (batch, STATE_DIM), jnp.float32)
    a = jax.random.normal(k_a, (batch, ACTION_DIM), jnp.float32)

    q = jax.block_until_ready(qvalue_forward(x, a, params))
    q_ref = qvalue_ref(x, a, params)
    assert q.shape == (batch, 1)
    assert jnp.allclose(q, q_ref, atol=1e-4, rtol=1e-4), "mismatch vs reference"

    # Ragged-batch check: multi-tile grid with wrapper-side padding.
    batch2 = 200
    q2 = jax.block_until_ready(
        qvalue_forward(x[:batch2], a[:batch2], params, block_batch=64))
    q2_ref = qvalue_ref(x[:batch2], a[:batch2], params)
    assert q2.shape == (batch2, 1)
    assert jnp.allclose(q2, q2_ref, atol=1e-4, rtol=1e-4), "mismatch (ragged)"

    print("KERNEL_OK")
</pallas_src>

<mosaic_0001>
module attributes {stable_mosaic.version = 11 : i64} {
  func.func @_qvalue_kernel(%arg0: i32, %arg1: memref<256x3xf32, #tpu.memory_space<vmem>>, %arg2: memref<256x1xf32, #tpu.memory_space<vmem>>, %arg3: memref<3x64xf32, #tpu.memory_space<vmem>>, %arg4: memref<1x64xf32, #tpu.memory_space<vmem>>, %arg5: memref<1x64xf32, #tpu.memory_space<vmem>>, %arg6: memref<64x64xf32, #tpu.memory_space<vmem>>, %arg7: memref<1x64xf32, #tpu.memory_space<vmem>>, %arg8: memref<1x64xf32, #tpu.memory_space<vmem>>, %arg9: memref<1xf32, #tpu.memory_space<smem>>, %arg10: memref<1x1x256xf32, #tpu.memory_space<vmem>>) attributes {dimension_semantics = [#tpu.dimension_semantics<parallel>], iteration_bounds = array<i64: 1>, scalar_prefetch = 0 : i64, scratch_operands = 0 : i64, tpu.core_type = #tpu.core_type<tc>, window_params = [{transform_indices = @transform_0, window_bounds = array<i64: 256, 3>}, {transform_indices = @transform_1, window_bounds = array<i64: 256, 1>}, {pipeline_mode = #tpu.pipeline_mode<synchronous>, transform_indices = @transform_2, window_bounds = array<i64: 3, 64>}, {pipeline_mode = #tpu.pipeline_mode<synchronous>, transform_indices = @transform_3, window_bounds = array<i64: 1, 64>}, {pipeline_mode = #tpu.pipeline_mode<synchronous>, transform_indices = @transform_4, window_bounds = array<i64: 1, 64>}, {pipeline_mode = #tpu.pipeline_mode<synchronous>, transform_indices = @transform_5, window_bounds = array<i64: 64, 64>}, {pipeline_mode = #tpu.pipeline_mode<synchronous>, transform_indices = @transform_6, window_bounds = array<i64: 1, 64>}, {pipeline_mode = #tpu.pipeline_mode<synchronous>, transform_indices = @transform_7, window_bounds = array<i64: 1, 64>}, {transform_indices = @transform_8, window_bounds = array<i64: 1>}, {transform_indices = @transform_9, window_bounds = array<i64: 1, 1, 256>}]} {
    %c0 = arith.constant 0 : index
    %c0_0 = arith.constant 0 : index
    %0 = vector.load %arg1[%c0, %c0_0] : memref<256x3xf32, #tpu.memory_space<vmem>>, vector<256x3xf32>
    %c0_1 = arith.constant 0 : index
    %c0_2 = arith.constant 0 : index
    %1 = vector.load %arg2[%c0_1, %c0_2] : memref<256x1xf32, #tpu.memory_space<vmem>>, vector<256x1xf32>
    %c0_3 = arith.constant 0 : index
    %c0_4 = arith.constant 0 : index
    %2 = vector.load %arg5[%c0_3, %c0_4] : memref<1x64xf32, #tpu.memory_space<vmem>>, vector<1x64xf32>
    %3 = vector.extract_strided_slice %0 {offsets = [0, 0], sizes = [256, 1], strides = [1, 1]} : vector<256x3xf32> to vector<256x1xf32>
    %c0_5 = arith.constant 0 : index
    %c0_6 = arith.constant 0 : index
    %4 = vector.load %arg3[%c0_5, %c0_6] : memref<3x64xf32, #tpu.memory_space<vmem>>, vector<1x64xf32>
    %5 = vector.broadcast %3 : vector<256x1xf32> to vector<256x64xf32>
    %6 = vector.broadcast %4 : vector<1x64xf32> to vector<256x64xf32>
    %7 = arith.mulf %5, %6 : vector<256x64xf32>
    %8 = vector.broadcast %2 : vector<1x64xf32> to vector<256x64xf32>
    %9 = arith.addf %8, %7 : vector<256x64xf32>
    %10 = vector.extract_strided_slice %0 {offsets = [0, 1], sizes = [256, 1], strides = [1, 1]} : vector<256x3xf32> to vector<256x1xf32>
    %c1 = arith.constant 1 : index
    %c0_7 = arith.constant 0 : index
    %11 = vector.load %arg3[%c1, %c0_7] : memref<3x64xf32, #tpu.memory_space<vmem>>, vector<1x64xf32>
    %12 = vector.broadcast %10 : vector<256x1xf32> to vector<256x64xf32>
    %13 = vector.broadcast %11 : vector<1x64xf32> to vector<256x64xf32>
    %14 = arith.mulf %12, %13 : vector<256x64xf32>
    %15 = arith.addf %9, %14 : vector<256x64xf32>
    %16 = vector.extract_strided_slice %0 {offsets = [0, 2], sizes = [256, 1], strides = [1, 1]} : vector<256x3xf32> to vector<256x1xf32>
    %c2 = arith.constant 2 : index
    %c0_8 = arith.constant 0 : index
    %17 = vector.load %arg3[%c2, %c0_8] : memref<3x64xf32, #tpu.memory_space<vmem>>, vector<1x64xf32>
    %18 = vector.broadcast %16 : vector<256x1xf32> to vector<256x64xf32>
    %19 = vector.broadcast %17 : vector<1x64xf32> to vector<256x64xf32>
    %20 = arith.mulf %18, %19 : vector<256x64xf32>
    %21 = arith.addf %15, %20 : vector<256x64xf32>
    %c0_9 = arith.constant 0 : index
    %c0_10 = arith.constant 0 : index
    %22 = vector.load %arg4[%c0_9, %c0_10] : memref<1x64xf32, #tpu.memory_space<vmem>>, vector<1x64xf32>
    %23 = vector.broadcast %1 : vector<256x1xf32> to vector<256x64xf32>
    %24 = vector.broadcast %22 : vector<1x64xf32> to vector<256x64xf32>
    %25 = arith.mulf %23, %24 : vector<256x64xf32>
    %26 = arith.addf %21, %25 : vector<256x64xf32>
    %cst = arith.constant 0.000000e+00 : f32
    %27 = vector.broadcast %cst : f32 to vector<256x64xf32>
    %28 = arith.maximumf %26, %27 : vector<256x64xf32>
    %c0_11 = arith.constant 0 : index
    %c0_12 = arith.constant 0 : index
    %29 = vector.load %arg6[%c0_11, %c0_12] : memref<64x64xf32, #tpu.memory_space<vmem>>, vector<64x64xf32>
    %cst_13 = arith.constant dense<0.000000e+00> : vector<256x64xf32>
    %30 = tpu.matmul %28, %29, %cst_13 {dimension_numbers = #tpu.dot_dimension_numbers<[1], [0], [0], [1], [0, 0, 1, 1], [], []>} : vector<256x64xf32>, vector<64x64xf32>, vector<256x64xf32> -> vector<256x64xf32>
    %c0_14 = arith.constant 0 : index
    %c0_15 = arith.constant 0 : index
    %31 = vector.load %arg7[%c0_14, %c0_15] : memref<1x64xf32, #tpu.memory_space<vmem>>, vector<1x64xf32>
    %32 = vector.broadcast %31 : vector<1x64xf32> to vector<256x64xf32>
    %33 = arith.addf %30, %32 : vector<256x64xf32>
    %cst_16 = arith.constant 0.000000e+00 : f32
    %34 = vector.broadcast %cst_16 : f32 to vector<256x64xf32>
    %35 = arith.maximumf %33, %34 : vector<256x64xf32>
    %c0_17 = arith.constant 0 : index
    %c0_18 = arith.constant 0 : index
    %36 = vector.load %arg8[%c0_17, %c0_18] : memref<1x64xf32, #tpu.memory_space<vmem>>, vector<1x64xf32>
    %cst_19 = arith.constant dense<0.000000e+00> : vector<1x256xf32>
    %37 = tpu.matmul %36, %35, %cst_19 {dimension_numbers = #tpu.dot_dimension_numbers<[1], [1], [0], [0], [0, 0, 1, 0], [], []>} : vector<1x64xf32>, vector<256x64xf32>, vector<1x256xf32> -> vector<1x256xf32>
    %c0_20 = arith.constant 0 : index
    %38 = memref.load %arg9[%c0_20] : memref<1xf32, #tpu.memory_space<smem>>
    %39 = vector.broadcast %38 : f32 to vector<1x256xf32>
    %40 = arith.addf %37, %39 : vector<1x256xf32>
    %41 = vector.shape_cast %40 : vector<1x256xf32> to vector<1x1x256xf32>
    %c0_21 = arith.constant 0 : index
    %c0_22 = arith.constant 0 : index
    %c0_23 = arith.constant 0 : index
    %42 = vector.load %arg10[%c0_21, %c0_22, %c0_23] : memref<1x1x256xf32, #tpu.memory_space<vmem>>, vector<1x1x256xf32>
    tpu.vector_store %arg10[%c0_21, %c0_22, %c0_23], %41 {strides = array<i32>} : memref<1x1x256xf32, #tpu.memory_space<vmem>>, vector<1x1x256xf32>,
    return
  }
  func.func @transform_0(%arg0: i32) -> (i32, i32) {
    %c0_i32 = arith.constant 0 : i32
    %c0_i32_0 = arith.constant 0 : i32
    return %arg0, %c0_i32 : i32, i32
  }
  func.func @transform_1(%arg0: i32) -> (i32, i32) {
    %c0_i32 = arith.constant 0 : i32
    %c0_i32_0 = arith.constant 0 : i32
    return %arg0, %c0_i32 : i32, i32
  }
  func.func @transform_2(%arg0: i32) -> (i32, i32) {
    %c0_i32 = arith.constant 0 : i32
    %c0_i32_0 = arith.constant 0 : i32
    %c0_i32_1 = arith.constant 0 : i32
    return %c0_i32, %c0_i32_0 : i32, i32
  }
  func.func @transform_3(%arg0: i32) -> (i32, i32) {
    %c0_i32 = arith.constant 0 : i32
    %c0_i32_0 = arith.constant 0 : i32
    %c0_i32_1 = arith.constant 0 : i32
    return %c0_i32, %c0_i32_0 : i32, i32
  }
  func.func @transform_4(%arg0: i32) -> (i32, i32) {
    %c0_i32 = arith.constant 0 : i32
    %c0_i32_0 = arith.constant 0 : i32
    %c0_i32_1 = arith.constant 0 : i32
    return %c0_i32, %c0_i32_0 : i32, i32
  }
  func.func @transform_5(%arg0: i32) -> (i32, i32) {
    %c0_i32 = arith.constant 0 : i32
    %c0_i32_0 = arith.constant 0 : i32
    %c0_i32_1 = arith.constant 0 : i32
    return %c0_i32, %c0_i32_0 : i32, i32
  }
  func.func @transform_6(%arg0: i32) -> (i32, i32) {
    %c0_i32 = arith.constant 0 : i32
    %c0_i32_0 = arith.constant 0 : i32
    %c0_i32_1 = arith.constant 0 : i32
    return %c0_i32, %c0_i32_0 : i32, i32
  }
  func.func @transform_7(%arg0: i32) -> (i32, i32) {
    %c0_i32 = arith.constant 0 : i32
    %c0_i32_0 = arith.constant 0 : i32
    %c0_i32_1 = arith.constant 0 : i32
    return %c0_i32, %c0_i32_0 : i32, i32
  }
  func.func @transform_8(%arg0: i32) -> i32 {
    %c0_i32 = arith.constant 0 : i32
    %c0_i32_0 = arith.constant 0 : i32
    return %c0_i32 : i32
  }
  func.func @transform_9(%arg0: i32) -> (i32, i32, i32) {
    %c0_i32 = arith.constant 0 : i32
    %c0_i32_0 = arith.constant 0 : i32
    %c0_i32_1 = arith.constant 0 : i32
    return %arg0, %c0_i32, %c0_i32_0 : i32, i32, i32
  }
}

</mosaic_0001>

<llo_original>
// kernel: tpu_custom_call.1
$region0: #{tpu_custom_call.1}
  #allocation0 [shape = 'u32[]', space=smem, size = 0x4, offset = 0x4, fixed_abs, tag = 'smem constant byte address 0x4 - core index']
  #allocation1 [shape = 'u32[144,128]{1,0:T(1,128)}', space=vmem, size = 0x12000, scoped, tag = 'internal scratch']
  #allocation2 [shape = 'f32[1]{0:T(128)S(6)}', space=smem, size = 0x200, scoped, tag = 'scoped memory for tpu_custom_call.1']
  %s0 = inlined_call_operand.vmem [shape: f32[256,3], index: 0, kind: input, shape index: {}]
  %s1 = inlined_call_operand.vmem [shape: f32[256,1], index: 1, kind: input, shape index: {}]
  %s2 = inlined_call_operand.vmem [shape: f32[3,64], index: 2, kind: input, shape index: {}]
  %s3 = inlined_call_operand.vmem [shape: f32[1,64], index: 3, kind: input, shape index: {}]
  %s4 = inlined_call_operand.vmem [shape: f32[1,64], index: 4, kind: input, shape index: {}]
  %s5 = inlined_call_operand.vmem [shape: f32[64,64], index: 5, kind: input, shape index: {}]
  %s6 = inlined_call_operand.vmem [shape: f32[1,64], index: 6, kind: input, shape index: {}]
  %s7 = inlined_call_operand.vmem [shape: f32[1,64], index: 7, kind: input, shape index: {}]
  %s8 = inlined_call_operand.<no memory space> [shape: f32[1], index: 8, kind: input, shape index: {}]
  %s9 = inlined_call_operand.hbm [shape: f32[1,1,256], index: 9, kind: output, shape index: {}]
  %s10 = sld [smem:[#allocation0]]
  $region46: #{tpu_custom_call.1} parent=0
    _
  %s12 = ssub.s32 1, %s10
  %s13 = scalar_select 0, %s12, %s10
  %14 = sst [smem:[#allocation2]] %s8
  $region1: #{tpu_custom_call.1} parent=0
    #allocation3 [shape = 'u8[1024]{0}', space=vmem, size = 0x400, scoped, tag = 'output window, operand 0, single buffered']
    #allocation4 [shape = 's32[1]{0}', space=sflag, size = 0x4, scoped, tag = 'scoped memory for tpu_custom_call.1']
    %15 = vsyncpa [#allocation4], 0
    // Predicated region
    $region2: #{tpu_custom_call.1} parent=1 // pred_check
      _
    $region3: #{tpu_custom_call.1} parent=1 // pred_check_branch
      %17 = sbr.rel (0) target = $region5
    $region4: #{tpu_custom_call.1} parent=1 // pred_region
      _
    $region5: #{tpu_custom_call.1} parent=1 // pred_fallthru
      _
    // Predicated region
    $region6: #{tpu_custom_call.1} parent=1 // pred_check
      _
    $region7: #{tpu_custom_call.1} parent=1 // pred_check_branch
      %19 = sbr.rel (0) target = $region9
    $region8: #{tpu_custom_call.1} parent=1 // pred_region
      _
    $region9: #{tpu_custom_call.1} parent=1 // pred_fallthru
      _
    // Predicated region
    $region10: #{tpu_custom_call.1} parent=1 // pred_check
      _
    $region11: #{tpu_custom_call.1} parent=1 // pred_check_branch
      %21 = sbr.rel (0) target = $region13
    $region12: #{tpu_custom_call.1} parent=1 // pred_region
      _
    $region13: #{tpu_custom_call.1} parent=1 // pred_fallthru
      _
    // Predicated region
    $region14: #{tpu_custom_call.1} parent=1 // pred_check
      _
    $region15: #{tpu_custom_call.1} parent=1 // pred_check_branch
      %23 = sbr.rel (0) target = $region17
    $region16: #{tpu_custom_call.1} parent=1 // pred_region
      _
    $region17: #{tpu_custom_call.1} parent=1 // pred_fallthru
      _
    // Predicated region
    $region18: #{tpu_custom_call.1} parent=1 // pred_check
      _
    $region19: #{tpu_custom_call.1} parent=1 // pred_check_branch
      %25 = sbr.rel (0) target = $region21
    $region20: #{tpu_custom_call.1} parent=1 // pred_region
      _
    $region21: #{tpu_custom_call.1} parent=1 // pred_fallthru
      _
    // Predicated region
    $region22: #{tpu_custom_call.1} parent=1 // pred_check
      _
    $region23: #{tpu_custom_call.1} parent=1 // pred_check_branch
      %27 = sbr.rel (0) target = $region25
    $region24: #{tpu_custom_call.1} parent=1 // pred_region
      _
    $region25: #{tpu_custom_call.1} parent=1 // pred_fallthru
      _
    // Predicated region
    $region26: #{tpu_custom_call.1} parent=1 // pred_check
      _
    $region27: #{tpu_custom_call.1} parent=1 // pred_check_branch
      %29 = sbr.rel (0) target = $region29
    $region28: #{tpu_custom_call.1} parent=1 // pred_region
      _
    $region29: #{tpu_custom_call.1} parent=1 // pred_fallthru
      _
    // Predicated region
    $region30: #{tpu_custom_call.1} parent=1 // pred_check
      _
    $region31: #{tpu_custom_call.1} parent=1 // pred_check_branch
      %31 = sbr.rel (0) target = $region33
    $region32: #{tpu_custom_call.1} parent=1 // pred_region
      _
    $region33: #{tpu_custom_call.1} parent=1 // pred_fallthru
      _
    // Predicated region
    $region34: #{tpu_custom_call.1} parent=1 // pred_check
      _
    $region35: #{tpu_custom_call.1} parent=1 // pred_check_branch
      %33 = sbr.rel (0) target = $region37
    $region36: #{tpu_custom_call.1} parent=1 // pred_region
      _
    $region37: #{tpu_custom_call.1} parent=1 // pred_fallthru
      _
    %v34 = vld [vmem:[%s0] sm:$0xff]
    %v35 = vld [vmem:[%s0 + $0x8] sm:$0xff]
    %v36 = vld [vmem:[%s0 + $0x10] sm:$0xff]
    %v37 = vld [vmem:[%s0 + $0x18] sm:$0xff]
    %v38 = vld [vmem:[%s0 + $0x20] sm:$0xff]
    %v39 = vld [vmem:[%s0 + $0x28] sm:$0xff]
    %v40 = vld [vmem:[%s0 + $0x30] sm:$0xff]
    %v41 = vld [vmem:[%s0 + $0x38] sm:$0xff]
    %v42 = vld [vmem:[%s0 + $0x40] sm:$0xff]
    %v43 = vld [vmem:[%s0 + $0x48] sm:$0xff]
    %v44 = vld [vmem:[%s0 + $0x50] sm:$0xff]
    %v45 = vld [vmem:[%s0 + $0x58] sm:$0xff]
    %v46 = vld [vmem:[%s0 + $0x60] sm:$0xff]
    %v47 = vld [vmem:[%s0 + $0x68] sm:$0xff]
    %v48 = vld [vmem:[%s0 + $0x70] sm:$0xff]
    %v49 = vld [vmem:[%s0 + $0x78] sm:$0xff]
    %v50 = vld [vmem:[%s0 + $0x80] sm:$0xff]
    %v51 = vld [vmem:[%s0 + $0x88] sm:$0xff]
    %v52 = vld [vmem:[%s0 + $0x90] sm:$0xff]
    %v53 = vld [vmem:[%s0 + $0x98] sm:$0xff]
    %v54 = vld [vmem:[%s0 + $0xa0] sm:$0xff]
    %v55 = vld [vmem:[%s0 + $0xa8] sm:$0xff]
    %v56 = vld [vmem:[%s0 + $0xb0] sm:$0xff]
    %v57 = vld [vmem:[%s0 + $0xb8] sm:$0xff]
    %v58 = vld [vmem:[%s0 + $0xc0] sm:$0xff]
    %v59 = vld [vmem:[%s0 + $0xc8] sm:$0xff]
    %v60 = vld [vmem:[%s0 + $0xd0] sm:$0xff]
    %v61 = vld [vmem:[%s0 + $0xd8] sm:$0xff]
    %v62 = vld [vmem:[%s0 + $0xe0] sm:$0xff]
    %v63 = vld [vmem:[%s0 + $0xe8] sm:$0xff]
    %v64 = vld [vmem:[%s0 + $0xf0] sm:$0xff]
    %v65 = vld [vmem:[%s0 + $0xf8] sm:$0xff]
    %v66 = vld [vmem:[%s1] sm:$0xff]
    %v67 = vld [vmem:[%s1 + $0x8] sm:$0xff]
    %v68 = vld [vmem:[%s1 + $0x10] sm:$0xff]
    %v69 = vld [vmem:[%s1 + $0x18] sm:$0xff]
    %v70 = vld [vmem:[%s1 + $0x20] sm:$0xff]
    %v71 = vld [vmem:[%s1 + $0x28] sm:$0xff]
    %v72 = vld [vmem:[%s1 + $0x30] sm:$0xff]
    %v73 = vld [vmem:[%s1 + $0x38] sm:$0xff]
    %v74 = vld [vmem:[%s1 + $0x40] sm:$0xff]
    %v75 = vld [vmem:[%s1 + $0x48] sm:$0xff]
    %v76 = vld [vmem:[%s1 + $0x50] sm:$0xff]
    %v77 = vld [vmem:[%s1 + $0x58] sm:$0xff]
    %v78 = vld [vmem:[%s1 + $0x60] sm:$0xff]
    %v79 = vld [vmem:[%s1 + $0x68] sm:$0xff]
    %v80 = vld [vmem:[%s1 + $0x70] sm:$0xff]
    %v81 = vld [vmem:[%s1 + $0x78] sm:$0xff]
    %v82 = vld [vmem:[%s1 + $0x80] sm:$0xff]
    %v83 = vld [vmem:[%s1 + $0x88] sm:$0xff]
    %v84 = vld [vmem:[%s1 + $0x90] sm:$0xff]
    %v85 = vld [vmem:[%s1 + $0x98] sm:$0xff]
    %v86 = vld [vmem:[%s1 + $0xa0] sm:$0xff]
    %v87 = vld [vmem:[%s1 + $0xa8] sm:$0xff]
    %v88 = vld [vmem:[%s1 + $0xb0] sm:$0xff]
    %v89 = vld [vmem:[%s1 + $0xb8] sm:$0xff]
    %v90 = vld [vmem:[%s1 + $0xc0] sm:$0xff]
    %v91 = vld [vmem:[%s1 + $0xc8] sm:$0xff]
    %v92 = vld [vmem:[%s1 + $0xd0] sm:$0xff]
    %v93 = vld [vmem:[%s1 + $0xd8] sm:$0xff]
    %v94 = vld [vmem:[%s1 + $0xe0] sm:$0xff]
    %v95 = vld [vmem:[%s1 + $0xe8] sm:$0xff]
    %v96 = vld [vmem:[%s1 + $0xf0] sm:$0xff]
    %v97 = vld [vmem:[%s1 + $0xf8] sm:$0xff]
    %v98 = vld [vmem:[%s4] sm:$0x1]
    %v99 = vld [vmem:[%s2] sm:$0x1]
    %101 = vset.pattern.permute.xlu0 0
    %102 = vperm.xlu0 %101, %v34
    %v103 = vpop.permute.xlu0 %102
    %106 = vset.pattern.permute.xlu0 0
    %107 = vperm.xlu0 %106, %v35
    %v108 = vpop.permute.xlu0 %107
    %111 = vset.pattern.permute.xlu0 0
    %112 = vperm.xlu0 %111, %v36
    %v113 = vpop.permute.xlu0 %112
    %116 = vset.pattern.permute.xlu0 0
    %117 = vperm.xlu0 %116, %v37
    %v118 = vpop.permute.xlu0 %117
    %121 = vset.pattern.permute.xlu0 0
    %122 = vperm.xlu0 %121, %v38
    %v123 = vpop.permute.xlu0 %122
    %126 = vset.pattern.permute.xlu0 0
    %127 = vperm.xlu0 %126, %v39
    %v128 = vpop.permute.xlu0 %127
    %131 = vset.pattern.permute.xlu0 0
    %132 = vperm.xlu0 %131, %v40
    %v133 = vpop.permute.xlu0 %132
    %136 = vset.pattern.permute.xlu0 0
    %137 = vperm.xlu0 %136, %v41
    %v138 = vpop.permute.xlu0 %137
    %141 = vset.pattern.permute.xlu0 0
    %142 = vperm.xlu0 %141, %v42
    %v143 = vpop.permute.xlu0 %142
    %146 = vset.pattern.permute.xlu0 0
    %147 = vperm.xlu0 %146, %v43
    %v148 = vpop.permute.xlu0 %147
    %151 = vset.pattern.permute.xlu0 0
    %152 = vperm.xlu0 %151, %v44
    %v153 = vpop.permute.xlu0 %152
    %156 = vset.pattern.permute.xlu0 0
    %157 = vperm.xlu0 %156, %v45
    %v158 = vpop.permute.xlu0 %157
    %161 = vset.pattern.permute.xlu0 0
    %162 = vperm.xlu0 %161, %v46
    %v163 = vpop.permute.xlu0 %162
    %166 = vset.pattern.permute.xlu0 0
    %167 = vperm.xlu0 %166, %v47
    %v168 = vpop.permute.xlu0 %167
    %171 = vset.pattern.permute.xlu0 0
    %172 = vperm.xlu0 %171, %v48
    %v173 = vpop.permute.xlu0 %172
    %176 = vset.pattern.permute.xlu0 0
    %177 = vperm.xlu0 %176, %v49
    %v178 = vpop.permute.xlu0 %177
    %181 = vset.pattern.permute.xlu0 0
    %182 = vperm.xlu0 %181, %v50
    %v183 = vpop.permute.xlu0 %182
    %186 = vset.pattern.permute.xlu0 0
    %187 = vperm.xlu0 %186, %v51
    %v188 = vpop.permute.xlu0 %187
    %191 = vset.pattern.permute.xlu0 0
    %192 = vperm.xlu0 %191, %v52
    %v193 = vpop.permute.xlu0 %192
    %196 = vset.pattern.permute.xlu0 0
    %197 = vperm.xlu0 %196, %v53
    %v198 = vpop.permute.xlu0 %197
    %201 = vset.pattern.permute.xlu0 0
    %202 = vperm.xlu0 %201, %v54
    %v203 = vpop.permute.xlu0 %202
    %206 = vset.pattern.permute.xlu0 0
    %207 = vperm.xlu0 %206, %v55
    %v208 = vpop.permute.xlu0 %207
    %211 = vset.pattern.permute.xlu0 0
    %212 = vperm.xlu0 %211, %v56
    %v213 = vpop.permute.xlu0 %212
    %216 = vset.pattern.permute.xlu0 0
    %217 = vperm.xlu0 %216, %v57
    %v218 = vpop.permute.xlu0 %217
    %221 = vset.pattern.permute.xlu0 0
    %222 = vperm.xlu0 %221, %v58
    %v223 = vpop.permute.xlu0 %222
    %226 = vset.pattern.permute.xlu0 0
    %227 = vperm.xlu0 %226, %v59
    %v228 = vpop.permute.xlu0 %227
    %231 = vset.pattern.permute.xlu0 0
    %232 = vperm.xlu0 %231, %v60
    %v233 = vpop.permute.xlu0 %232
    %236 = vset.pattern.permute.xlu0 0
    %237 = vperm.xlu0 %236, %v61
    %v238 = vpop.permute.xlu0 %237
    %241 = vset.pattern.permute.xlu0 0
    %242 = vperm.xlu0 %241, %v62
    %v243 = vpop.permute.xlu0 %242
    %246 = vset.pattern.permute.xlu0 0
    %247 = vperm.xlu0 %246, %v63
    %v248 = vpop.permute.xlu0 %247
    %251 = vset.pattern.permute.xlu0 0
    %252 = vperm.xlu0 %251, %v64
    %v253 = vpop.permute.xlu0 %252
    %256 = vset.pattern.permute.xlu0 0
    %257 = vperm.xlu0 %256, %v65
    %v258 = vpop.permute.xlu0 %257
    %v260 = vlaneseq
    %v261 = vshrl.u32 %v260, 7
    %v262 = vsub.s32 0, %v261
    %v263 = vrot.slane %v99, %v262
    %v264 = vmul.f32 %v103, %v263
    %v265 = vmul.f32 %v108, %v263
    %v266 = vmul.f32 %v113, %v263
    %v267 = vmul.f32 %v118, %v263
    %v268 = vmul.f32 %v123, %v263
    %v269 = vmul.f32 %v128, %v263
    %v270 = vmul.f32 %v133, %v263
    %v271 = vmul.f32 %v138, %v263
    %v272 = vmul.f32 %v143, %v263
    %v273 = vmul.f32 %v148, %v263
    %v274 = vmul.f32 %v153, %v263
    %v275 = vmul.f32 %v158, %v263
    %v276 = vmul.f32 %v163, %v263
    %v277 = vmul.f32 %v168, %v263
    %v278 = vmul.f32 %v173, %v263
    %v279 = vmul.f32 %v178, %v263
    %v280 = vmul.f32 %v183, %v263
    %v281 = vmul.f32 %v188, %v263
    %v282 = vmul.f32 %v193, %v263
    %v283 = vmul.f32 %v198, %v263
    %v284 = vmul.f32 %v203, %v263
    %v285 = vmul.f32 %v208, %v263
    %v286 = vmul.f32 %v213, %v263
    %v287 = vmul.f32 %v218, %v263
    %v288 = vmul.f32 %v223, %v263
    %v289 = vmul.f32 %v228, %v263
    %v290 = vmul.f32 %v233, %v263
    %v291 = vmul.f32 %v238, %v263
    %v292 = vmul.f32 %v243, %v263
    %v293 = vmul.f32 %v248, %v263
    %v294 = vmul.f32 %v253, %v263
    %v295 = vmul.f32 %v258, %v263
    %v297 = vlaneseq
    %v298 = vshrl.u32 %v297, 7
    %v299 = vsub.s32 0, %v298
    %v300 = vrot.slane %v98, %v299
    %v302 = vadd.f32 %v300, %v264
    %v303 = vadd.f32 %v300, %v265
    %v304 = vadd.f32 %v300, %v266
    %v305 = vadd.f32 %v300, %v267
    %v306 = vadd.f32 %v300, %v268
    %v307 = vadd.f32 %v300, %v269
    %v308 = vadd.f32 %v300, %v270
    %v309 = vadd.f32 %v300, %v271
    %v310 = vadd.f32 %v300, %v272
    %v311 = vadd.f32 %v300, %v273
    %v312 = vadd.f32 %v300, %v274
    %v313 = vadd.f32 %v300, %v275
    %v314 = vadd.f32 %v300, %v276
    %v315 = vadd.f32 %v300, %v277
    %v316 = vadd.f32 %v300, %v278
    %v317 = vadd.f32 %v300, %v279
    %v318 = vadd.f32 %v300, %v280
    %v319 = vadd.f32 %v300, %v281
    %v320 = vadd.f32 %v300, %v282
    %v321 = vadd.f32 %v300, %v283
    %v322 = vadd.f32 %v300, %v284
    %v323 = vadd.f32 %v300, %v285
    %v324 = vadd.f32 %v300, %v286
    %v325 = vadd.f32 %v300, %v287
    %v326 = vadd.f32 %v300, %v288
    %v327 = vadd.f32 %v300, %v289
    %v328 = vadd.f32 %v300, %v290
    %v329 = vadd.f32 %v300, %v291
    %v330 = vadd.f32 %v300, %v292
    %v331 = vadd.f32 %v300, %v293
    %v332 = vadd.f32 %v300, %v294
    %v333 = vadd.f32 %v300, %v295
    %v334 = vld [vmem:[%s2 + $0x1] sm:$0x1]
    %335 = vset.pattern.permute.xlu0 1
    %336 = vperm.xlu0 %335, %v34
    %v337 = vpop.permute.xlu0 %336
    %339 = vset.pattern.permute.xlu0 1
    %340 = vperm.xlu0 %339, %v35
    %v341 = vpop.permute.xlu0 %340
    %343 = vset.pattern.permute.xlu0 1
    %344 = vperm.xlu0 %343, %v36
    %v345 = vpop.permute.xlu0 %344
    %347 = vset.pattern.permute.xlu0 1
    %348 = vperm.xlu0 %347, %v37
    %v349 = vpop.permute.xlu0 %348
    %351 = vset.pattern.permute.xlu0 1
    %352 = vperm.xlu0 %351, %v38
    %v353 = vpop.permute.xlu0 %352
    %355 = vset.pattern.permute.xlu0 1
    %356 = vperm.xlu0 %355, %v39
    %v357 = vpop.permute.xlu0 %356
    %359 = vset.pattern.permute.xlu0 1
    %360 = vperm.xlu0 %359, %v40
    %v361 = vpop.permute.xlu0 %360
    %363 = vset.pattern.permute.xlu0 1
    %364 = vperm.xlu0 %363, %v41
    %v365 = vpop.permute.xlu0 %364
    %367 = vset.pattern.permute.xlu0 1
    %368 = vperm.xlu0 %367, %v42
    %v369 = vpop.permute.xlu0 %368
    %371 = vset.pattern.permute.xlu0 1
    %372 = vperm.xlu0 %371, %v43
    %v373 = vpop.permute.xlu0 %372
    %375 = vset.pattern.permute.xlu0 1
    %376 = vperm.xlu0 %375, %v44
    %v377 = vpop.permute.xlu0 %376
    %379 = vset.pattern.permute.xlu0 1
    %380 = vperm.xlu0 %379, %v45
    %v381 = vpop.permute.xlu0 %380
    %383 = vset.pattern.permute.xlu0 1
    %384 = vperm.xlu0 %383, %v46
    %v385 = vpop.permute.xlu0 %384
    %387 = vset.pattern.permute.xlu0 1
    %388 = vperm.xlu0 %387, %v47
    %v389 = vpop.permute.xlu0 %388
    %391 = vset.pattern.permute.xlu0 1
    %392 = vperm.xlu0 %391, %v48
    %v393 = vpop.permute.xlu0 %392
    %395 = vset.pattern.permute.xlu0 1
    %396 = vperm.xlu0 %395, %v49
    %v397 = vpop.permute.xlu0 %396
    %399 = vset.pattern.permute.xlu0 1
    %400 = vperm.xlu0 %399, %v50
    %v401 = vpop.permute.xlu0 %400
    %403 = vset.pattern.permute.xlu0 1
    %404 = vperm.xlu0 %403, %v51
    %v405 = vpop.permute.xlu0 %404
    %407 = vset.pattern.permute.xlu0 1
    %408 = vperm.xlu0 %407, %v52
    %v409 = vpop.permute.xlu0 %408
    %411 = vset.pattern.permute.xlu0 1
    %412 = vperm.xlu0 %411, %v53
    %v413 = vpop.permute.xlu0 %412
    %415 = vset.pattern.permute.xlu0 1
    %416 = vperm.xlu0 %415, %v54
    %v417 = vpop.permute.xlu0 %416
    %419 = vset.pattern.permute.xlu0 1
    %420 = vperm.xlu0 %419, %v55
    %v421 = vpop.permute.xlu0 %420
    %423 = vset.pattern.permute.xlu0 1
    %424 = vperm.xlu0 %423, %v56
    %v425 = vpop.permute.xlu0 %424
    %427 = vset.pattern.permute.xlu0 1
    %428 = vperm.xlu0 %427, %v57
    %v429 = vpop.permute.xlu0 %428
    %431 = vset.pattern.permute.xlu0 1
    %432 = vperm.xlu0 %431, %v58
    %v433 = vpop.permute.xlu0 %432
    %435 = vset.pattern.permute.xlu0 1
    %436 = vperm.xlu0 %435, %v59
    %v437 = vpop.permute.xlu0 %436
    %439 = vset.pattern.permute.xlu0 1
    %440 = vperm.xlu0 %439, %v60
    %v441 = vpop.permute.xlu0 %440
    %443 = vset.pattern.permute.xlu0 1
    %444 = vperm.xlu0 %443, %v61
    %v445 = vpop.permute.xlu0 %444
    %447 = vset.pattern.permute.xlu0 1
    %448 = vperm.xlu0 %447, %v62
    %v449 = vpop.permute.xlu0 %448
    %451 = vset.pattern.permute.xlu0 1
    %452 = vperm.xlu0 %451, %v63
    %v453 = vpop.permute.xlu0 %452
    %455 = vset.pattern.permute.xlu0 1
    %456 = vperm.xlu0 %455, %v64
    %v457 = vpop.permute.xlu0 %456
    %459 = vset.pattern.permute.xlu0 1
    %460 = vperm.xlu0 %459, %v65
    %v461 = vpop.permute.xlu0 %460
    %v463 = vlaneseq
    %v464 = vshrl.u32 %v463, 7
    %v465 = vsub.s32 0, %v464
    %v466 = vrot.slane %v334, %v465
    %v467 = vmul.f32 %v337, %v466
    %v468 = vmul.f32 %v341, %v466
    %v469 = vmul.f32 %v345, %v466
    %v470 = vmul.f32 %v349, %v466
    %v471 = vmul.f32 %v353, %v466
    %v472 = vmul.f32 %v357, %v466
    %v473 = vmul.f32 %v361, %v466
    %v474 = vmul.f32 %v365, %v466
    %v475 = vmul.f32 %v369, %v466
    %v476 = vmul.f32 %v373, %v466
    %v477 = vmul.f32 %v377, %v466
    %v478 = vmul.f32 %v381, %v466
    %v479 = vmul.f32 %v385, %v466
    %v480 = vmul.f32 %v389, %v466
    %v481 = vmul.f32 %v393, %v466
    %v482 = vmul.f32 %v397, %v466
    %v483 = vmul.f32 %v401, %v466
    %v484 = vmul.f32 %v405, %v466
    %v485 = vmul.f32 %v409, %v466
    %v486 = vmul.f32 %v413, %v466
    %v487 = vmul.f32 %v417, %v466
    %v488 = vmul.f32 %v421, %v466
    %v489 = vmul.f32 %v425, %v466
    %v490 = vmul.f32 %v429, %v466
    %v491 = vmul.f32 %v433, %v466
    %v492 = vmul.f32 %v437, %v466
    %v493 = vmul.f32 %v441, %v466
    %v494 = vmul.f32 %v445, %v466
    %v495 = vmul.f32 %v449, %v466
    %v496 = vmul.f32 %v453, %v466
    %v497 = vmul.f32 %v457, %v466
    %v498 = vmul.f32 %v461, %v466
    %v499 = vadd.f32 %v302, %v467
    %v500 = vadd.f32 %v303, %v468
    %v501 = vadd.f32 %v304, %v469
    %v502 = vadd.f32 %v305, %v470
    %v503 = vadd.f32 %v306, %v471
    %v504 = vadd.f32 %v307, %v472
    %v505 = vadd.f32 %v308, %v473
    %v506 = vadd.f32 %v309, %v474
    %v507 = vadd.f32 %v310, %v475
    %v508 = vadd.f32 %v311, %v476
    %v509 = vadd.f32 %v312, %v477
    %v510 = vadd.f32 %v313, %v478
    %v511 = vadd.f32 %v314, %v479
    %v512 = vadd.f32 %v315, %v480
    %v513 = vadd.f32 %v316, %v481
    %v514 = vadd.f32 %v317, %v482
    %v515 = vadd.f32 %v318, %v483
    %v516 = vadd.f32 %v319, %v484
    %v517 = vadd.f32 %v320, %v485
    %v518 = vadd.f32 %v321, %v486
    %v519 = vadd.f32 %v322, %v487
    %v520 = vadd.f32 %v323, %v488
    %v521 = vadd.f32 %v324, %v489
    %v522 = vadd.f32 %v325, %v490
    %v523 = vadd.f32 %v326, %v491
    %v524 = vadd.f32 %v327, %v492
    %v525 = vadd.f32 %v328, %v493
    %v526 = vadd.f32 %v329, %v494
    %v527 = vadd.f32 %v330, %v495
    %v528 = vadd.f32 %v331, %v496
    %v529 = vadd.f32 %v332, %v497
    %v530 = vadd.f32 %v333, %v498
    %v531 = vld [vmem:[%s2 + $0x2] sm:$0x1]
    %532 = vset.pattern.permute.xlu0 2
    %533 = vperm.xlu0 %532, %v34
    %v534 = vpop.permute.xlu0 %533
    %536 = vset.pattern.permute.xlu0 2
    %537 = vperm.xlu0 %536, %v35
    %v538 = vpop.permute.xlu0 %537
    %540 = vset.pattern.permute.xlu0 2
    %541 = vperm.xlu0 %540, %v36
    %v542 = vpop.permute.xlu0 %541
    %544 = vset.pattern.permute.xlu0 2
    %545 = vperm.xlu0 %544, %v37
    %v546 = vpop.permute.xlu0 %545
    %548 = vset.pattern.permute.xlu0 2
    %549 = vperm.xlu0 %548, %v38
    %v550 = vpop.permute.xlu0 %549
    %552 = vset.pattern.permute.xlu0 2
    %553 = vperm.xlu0 %552, %v39
    %v554 = vpop.permute.xlu0 %553
    %556 = vset.pattern.permute.xlu0 2
    %557 = vperm.xlu0 %556, %v40
    %v558 = vpop.permute.xlu0 %557
    %560 = vset.pattern.permute.xlu0 2
    %561 = vperm.xlu0 %560, %v41
    %v562 = vpop.permute.xlu0 %561
    %564 = vset.pattern.permute.xlu0 2
    %565 = vperm.xlu0 %564, %v42
    %v566 = vpop.permute.xlu0 %565
    %568 = vset.pattern.permute.xlu0 2
    %569 = vperm.xlu0 %568, %v43
    %v570 = vpop.permute.xlu0 %569
    %572 = vset.pattern.permute.xlu0 2
    %573 = vperm.xlu0 %572, %v44
    %v574 = vpop.permute.xlu0 %573
    %576 = vset.pattern.permute.xlu0 2
    %577 = vperm.xlu0 %576, %v45
    %v578 = vpop.permute.xlu0 %577
    %580 = vset.pattern.permute.xlu0 2
    %581 = vperm.xlu0 %580, %v46
    %v582 = vpop.permute.xlu0 %581
    %584 = vset.pattern.permute.xlu0 2
    %585 = vperm.xlu0 %584, %v47
    %v586 = vpop.permute.xlu0 %585
    %588 = vset.pattern.permute.xlu0 2
    %589 = vperm.xlu0 %588, %v48
    %v590 = vpop.permute.xlu0 %589
    %592 = vset.pattern.permute.xlu0 2
    %593 = vperm.xlu0 %592, %v49
    %v594 = vpop.permute.xlu0 %593
    %596 = vset.pattern.permute.xlu0 2
    %597 = vperm.xlu0 %596, %v50
    %v598 = vpop.permute.xlu0 %597
    %600 = vset.pattern.permute.xlu0 2
    %601 = vperm.xlu0 %600, %v51
    %v602 = vpop.permute.xlu0 %601
    %604 = vset.pattern.permute.xlu0 2
    %605 = vperm.xlu0 %604, %v52
    %v606 = vpop.permute.xlu0 %605
    %608 = vset.pattern.permute.xlu0 2
    %609 = vperm.xlu0 %608, %v53
    %v610 = vpop.permute.xlu0 %609
    %612 = vset.pattern.permute.xlu0 2
    %613 = vperm.xlu0 %612, %v54
    %v614 = vpop.permute.xlu0 %613
    %616 = vset.pattern.permute.xlu0 2
    %617 = vperm.xlu0 %616, %v55
    %v618 = vpop.permute.xlu0 %617
    %620 = vset.pattern.permute.xlu0 2
    %621 = vperm.xlu0 %620, %v56
    %v622 = vpop.permute.xlu0 %621
    %624 = vset.pattern.permute.xlu0 2
    %625 = vperm.xlu0 %624, %v57
    %v626 = vpop.permute.xlu0 %625
    %628 = vset.pattern.permute.xlu0 2
    %629 = vperm.xlu0 %628, %v58
    %v630 = vpop.permute.xlu0 %629
    %632 = vset.pattern.permute.xlu0 2
    %633 = vperm.xlu0 %632, %v59
    %v634 = vpop.permute.xlu0 %633
    %636 = vset.pattern.permute.xlu0 2
    %637 = vperm.xlu0 %636, %v60
    %v638 = vpop.permute.xlu0 %637
    %640 = vset.pattern.permute.xlu0 2
    %641 = vperm.xlu0 %640, %v61
    %v642 = vpop.permute.xlu0 %641
    %644 = vset.pattern.permute.xlu0 2
    %645 = vperm.xlu0 %644, %v62
    %v646 = vpop.permute.xlu0 %645
    %648 = vset.pattern.permute.xlu0 2
    %649 = vperm.xlu0 %648, %v63
    %v650 = vpop.permute.xlu0 %649
    %652 = vset.pattern.permute.xlu0 2
    %653 = vperm.xlu0 %652, %v64
    %v654 = vpop.permute.xlu0 %653
    %656 = vset.pattern.permute.xlu0 2
    %657 = vperm.xlu0 %656, %v65
    %v658 = vpop.permute.xlu0 %657
    %v660 = vlaneseq
    %v661 = vshrl.u32 %v660, 7
    %v662 = vsub.s32 0, %v661
    %v663 = vrot.slane %v531, %v662
    %v664 = vmul.f32 %v534, %v663
    %v665 = vmul.f32 %v538, %v663
    %v666 = vmul.f32 %v542, %v663
    %v667 = vmul.f32 %v546, %v663
    %v668 = vmul.f32 %v550, %v663
    %v669 = vmul.f32 %v554, %v663
    %v670 = vmul.f32 %v558, %v663
    %v671 = vmul.f32 %v562, %v663
    %v672 = vmul.f32 %v566, %v663
    %v673 = vmul.f32 %v570, %v663
    %v674 = vmul.f32 %v574, %v663
    %v675 = vmul.f32 %v578, %v663
    %v676 = vmul.f32 %v582, %v663
    %v677 = vmul.f32 %v586, %v663
    %v678 = vmul.f32 %v590, %v663
    %v679 = vmul.f32 %v594, %v663
    %v680 = vmul.f32 %v598, %v663
    %v681 = vmul.f32 %v602, %v663
    %v682 = vmul.f32 %v606, %v663
    %v683 = vmul.f32 %v610, %v663
    %v684 = vmul.f32 %v614, %v663
    %v685 = vmul.f32 %v618, %v663
    %v686 = vmul.f32 %v622, %v663
    %v687 = vmul.f32 %v626, %v663
    %v688 = vmul.f32 %v630, %v663
    %v689 = vmul.f32 %v634, %v663
    %v690 = vmul.f32 %v638, %v663
    %v691 = vmul.f32 %v642, %v663
    %v692 = vmul.f32 %v646, %v663
    %v693 = vmul.f32 %v650, %v663
    %v694 = vmul.f32 %v654, %v663
    %v695 = vmul.f32 %v658, %v663
    %v696 = vadd.f32 %v499, %v664
    %v697 = vadd.f32 %v500, %v665
    %v698 = vadd.f32 %v501, %v666
    %v699 = vadd.f32 %v502, %v667
    %v700 = vadd.f32 %v503, %v668
    %v701 = vadd.f32 %v504, %v669
    %v702 = vadd.f32 %v505, %v670
    %v703 = vadd.f32 %v506, %v671
    %v704 = vadd.f32 %v507, %v672
    %v705 = vadd.f32 %v508, %v673
    %v706 = vadd.f32 %v509, %v674
    %v707 = vadd.f32 %v510, %v675
    %v708 = vadd.f32 %v511, %v676
    %v709 = vadd.f32 %v512, %v677
    %v710 = vadd.f32 %v513, %v678
    %v711 = vadd.f32 %v514, %v679
    %v712 = vadd.f32 %v515, %v680
    %v713 = vadd.f32 %v516, %v681
    %v714 = vadd.f32 %v517, %v682
    %v715 = vadd.f32 %v518, %v683
    %v716 = vadd.f32 %v519, %v684
    %v717 = vadd.f32 %v520, %v685
    %v718 = vadd.f32 %v521, %v686
    %v719 = vadd.f32 %v522, %v687
    %v720 = vadd.f32 %v523, %v688
    %v721 = vadd.f32 %v524, %v689
    %v722 = vadd.f32 %v525, %v690
    %v723 = vadd.f32 %v526, %v691
    %v724 = vadd.f32 %v527, %v692
    %v725 = vadd.f32 %v528, %v693
    %v726 = vadd.f32 %v529, %v694
    %v727 = vadd.f32 %v530, %v695
    %v728 = vld [vmem:[%s3] sm:$0x1]
    %730 = vset.pattern.permute.xlu0 0
    %731 = vperm.xlu0 %730, %v66
    %v732 = vpop.permute.xlu0 %731
    %735 = vset.pattern.permute.xlu0 0
    %736 = vperm.xlu0 %735, %v67
    %v737 = vpop.permute.xlu0 %736
    %740 = vset.pattern.permute.xlu0 0
    %741 = vperm.xlu0 %740, %v68
    %v742 = vpop.permute.xlu0 %741
    %745 = vset.pattern.permute.xlu0 0
    %746 = vperm.xlu0 %745, %v69
    %v747 = vpop.permute.xlu0 %746
    %750 = vset.pattern.permute.xlu0 0
    %751 = vperm.xlu0 %750, %v70
    %v752 = vpop.permute.xlu0 %751
    %755 = vset.pattern.permute.xlu0 0
    %756 = vperm.xlu0 %755, %v71
    %v757 = vpop.permute.xlu0 %756
    %760 = vset.pattern.permute.xlu0 0
    %761 = vperm.xlu0 %760, %v72
    %v762 = vpop.permute.xlu0 %761
    %765 = vset.pattern.permute.xlu0 0
    %766 = vperm.xlu0 %765, %v73
    %v767 = vpop.permute.xlu0 %766
    %770 = vset.pattern.permute.xlu0 0
    %771 = vperm.xlu0 %770, %v74
    %v772 = vpop.permute.xlu0 %771
    %775 = vset.pattern.permute.xlu0 0
    %776 = vperm.xlu0 %775, %v75
    %v777 = vpop.permute.xlu0 %776
    %780 = vset.pattern.permute.xlu0 0
    %781 = vperm.xlu0 %780, %v76
    %v782 = vpop.permute.xlu0 %781
    %785 = vset.pattern.permute.xlu0 0
    %786 = vperm.xlu0 %785, %v77
    %v787 = vpop.permute.xlu0 %786
    %790 = vset.pattern.permute.xlu0 0
    %791 = vperm.xlu0 %790, %v78
    %v792 = vpop.permute.xlu0 %791
    %795 = vset.pattern.permute.xlu0 0
    %796 = vperm.xlu0 %795, %v79
    %v797 = vpop.permute.xlu0 %796
    %800 = vset.pattern.permute.xlu0 0
    %801 = vperm.xlu0 %800, %v80
    %v802 = vpop.permute.xlu0 %801
    %805 = vset.pattern.permute.xlu0 0
    %806 = vperm.xlu0 %805, %v81
    %v807 = vpop.permute.xlu0 %806
    %810 = vset.pattern.permute.xlu0 0
    %811 = vperm.xlu0 %810, %v82
    %v812 = vpop.permute.xlu0 %811
    %815 = vset.pattern.permute.xlu0 0
    %816 = vperm.xlu0 %815, %v83
    %v817 = vpop.permute.xlu0 %816
    %820 = vset.pattern.permute.xlu0 0
    %821 = vperm.xlu0 %820, %v84
    %v822 = vpop.permute.xlu0 %821
    %825 = vset.pattern.permute.xlu0 0
    %826 = vperm.xlu0 %825, %v85
    %v827 = vpop.permute.xlu0 %826
    %830 = vset.pattern.permute.xlu0 0
    %831 = vperm.xlu0 %830, %v86
    %v832 = vpop.permute.xlu0 %831
    %835 = vset.pattern.permute.xlu0 0
    %836 = vperm.xlu0 %835, %v87
    %v837 = vpop.permute.xlu0 %836
    %840 = vset.pattern.permute.xlu0 0
    %841 = vperm.xlu0 %840, %v88
    %v842 = vpop.permute.xlu0 %841
    %845 = vset.pattern.permute.xlu0 0
    %846 = vperm.xlu0 %845, %v89
    %v847 = vpop.permute.xlu0 %846
    %850 = vset.pattern.permute.xlu0 0
    %851 = vperm.xlu0 %850, %v90
    %v852 = vpop.permute.xlu0 %851
    %855 = vset.pattern.permute.xlu0 0
    %856 = vperm.xlu0 %855, %v91
    %v857 = vpop.permute.xlu0 %856
    %860 = vset.pattern.permute.xlu0 0
    %861 = vperm.xlu0 %860, %v92
    %v862 = vpop.permute.xlu0 %861
    %865 = vset.pattern.permute.xlu0 0
    %866 = vperm.xlu0 %865, %v93
    %v867 = vpop.permute.xlu0 %866
    %870 = vset.pattern.permute.xlu0 0
    %871 = vperm.xlu0 %870, %v94
    %v872 = vpop.permute.xlu0 %871
    %875 = vset.pattern.permute.xlu0 0
    %876 = vperm.xlu0 %875, %v95
    %v877 = vpop.permute.xlu0 %876
    %880 = vset.pattern.permute.xlu0 0
    %881 = vperm.xlu0 %880, %v96
    %v882 = vpop.permute.xlu0 %881
    %885 = vset.pattern.permute.xlu0 0
    %886 = vperm.xlu0 %885, %v97
    %v887 = vpop.permute.xlu0 %886
    %v890 = vlaneseq
    %v891 = vshrl.u32 %v890, 7
    %v892 = vsub.s32 0, %v891
    %v893 = vrot.slane %v728, %v892
    %v895 = vmul.f32 %v732, %v893
    %v896 = vmul.f32 %v737, %v893
    %v897 = vmul.f32 %v742, %v893
    %v898 = vmul.f32 %v747, %v893
    %v899 = vmul.f32 %v752, %v893
    %v900 = vmul.f32 %v757, %v893
    %v901 = vmul.f32 %v762, %v893
    %v902 = vmul.f32 %v767, %v893
    %v903 = vmul.f32 %v772, %v893
    %v904 = vmul.f32 %v777, %v893
    %v905 = vmul.f32 %v782, %v893
    %v906 = vmul.f32 %v787, %v893
    %v907 = vmul.f32 %v792, %v893
    %v908 = vmul.f32 %v797, %v893
    %v909 = vmul.f32 %v802, %v893
    %v910 = vmul.f32 %v807, %v893
    %v911 = vmul.f32 %v812, %v893
    %v912 = vmul.f32 %v817, %v893
    %v913 = vmul.f32 %v822, %v893
    %v914 = vmul.f32 %v827, %v893
    %v915 = vmul.f32 %v832, %v893
    %v916 = vmul.f32 %v837, %v893
    %v917 = vmul.f32 %v842, %v893
    %v918 = vmul.f32 %v847, %v893
    %v919 = vmul.f32 %v852, %v893
    %v920 = vmul.f32 %v857, %v893
    %v921 = vmul.f32 %v862, %v893
    %v922 = vmul.f32 %v867, %v893
    %v923 = vmul.f32 %v872, %v893
    %v924 = vmul.f32 %v877, %v893
    %v925 = vmul.f32 %v882, %v893
    %v926 = vmul.f32 %v887, %v893
    %v927 = vadd.f32 %v696, %v895
    %v928 = vadd.f32 %v697, %v896
    %v929 = vadd.f32 %v698, %v897
    %v930 = vadd.f32 %v699, %v898
    %v931 = vadd.f32 %v700, %v899
    %v932 = vadd.f32 %v701, %v900
    %v933 = vadd.f32 %v702, %v901
    %v934 = vadd.f32 %v703, %v902
    %v935 = vadd.f32 %v704, %v903
    %v936 = vadd.f32 %v705, %v904
    %v937 = vadd.f32 %v706, %v905
    %v938 = vadd.f32 %v707, %v906
    %v939 = vadd.f32 %v708, %v907
    %v940 = vadd.f32 %v709, %v908
    %v941 = vadd.f32 %v710, %v909
    %v942 = vadd.f32 %v711, %v910
    %v943 = vadd.f32 %v712, %v911
    %v944 = vadd.f32 %v713, %v912
    %v945 = vadd.f32 %v714, %v913
    %v946 = vadd.f32 %v715, %v914
    %v947 = vadd.f32 %v716, %v915
    %v948 = vadd.f32 %v717, %v916
    %v949 = vadd.f32 %v718, %v917
    %v950 = vadd.f32 %v719, %v918
    %v951 = vadd.f32 %v720, %v919
    %v952 = vadd.f32 %v721, %v920
    %v953 = vadd.f32 %v722, %v921
    %v954 = vadd.f32 %v723, %v922
    %v955 = vadd.f32 %v724, %v923
    %v956 = vadd.f32 %v725, %v924
    %v957 = vadd.f32 %v726, %v925
    %v958 = vadd.f32 %v727, %v926
    %v959 = vmax.f32 %v927, 0.0
    %v960 = vmax.f32 %v928, 0.0
    %v961 = vmax.f32 %v929, 0.0
    %v962 = vmax.f32 %v930, 0.0
    %v963 = vmax.f32 %v931, 0.0
    %v964 = vmax.f32 %v932, 0.0
    %v965 = vmax.f32 %v933, 0.0
    %v966 = vmax.f32 %v934, 0.0
    %v967 = vmax.f32 %v935, 0.0
    %v968 = vmax.f32 %v936, 0.0
    %v969 = vmax.f32 %v937, 0.0
    %v970 = vmax.f32 %v938, 0.0
    %v971 = vmax.f32 %v939, 0.0
    %v972 = vmax.f32 %v940, 0.0
    %v973 = vmax.f32 %v941, 0.0
    %v974 = vmax.f32 %v942, 0.0
    %v975 = vmax.f32 %v943, 0.0
    %v976 = vmax.f32 %v944, 0.0
    %v977 = vmax.f32 %v945, 0.0
    %v978 = vmax.f32 %v946, 0.0
    %v979 = vmax.f32 %v947, 0.0
    %v980 = vmax.f32 %v948, 0.0
    %v981 = vmax.f32 %v949, 0.0
    %v982 = vmax.f32 %v950, 0.0
    %v983 = vmax.f32 %v951, 0.0
    %v984 = vmax.f32 %v952, 0.0
    %v985 = vmax.f32 %v953, 0.0
    %v986 = vmax.f32 %v954, 0.0
    %v987 = vmax.f32 %v955, 0.0
    %v988 = vmax.f32 %v956, 0.0
    %v989 = vmax.f32 %v957, 0.0
    %v990 = vmax.f32 %v958, 0.0
    %v991 = vld [vmem:[%s5] sm:$0xff]
    %v992 = vld [vmem:[%s5 + $0x8] sm:$0xff]
    %v993 = vld [vmem:[%s5 + $0x10] sm:$0xff]
    %v994 = vld [vmem:[%s5 + $0x18] sm:$0xff]
    %v995 = vld [vmem:[%s5 + $0x20] sm:$0xff]
    %v996 = vld [vmem:[%s5 + $0x28] sm:$0xff]
    %v997 = vld [vmem:[%s5 + $0x30] sm:$0xff]
    %v998 = vld [vmem:[%s5 + $0x38] sm:$0xff]
    %v999 = vld [vmem:[%s6] sm:$0x1]
    %v1001 = vlaneseq
    %v1002 = vshrl.u32 %v1001, 7
    %v1003 = vsub.s32 0, %v1002
    %v1004 = vrot.slane %v999, %v1003
    %vm1006 = vcmask 523264
    %v1008 = vsel %vm1006, %v959, 0
    %v1011 = vsel %vm1006, %v960, 0
    %v1014 = vsel %vm1006, %v961, 0
    %v1017 = vsel %vm1006, %v962, 0
    %v1020 = vsel %vm1006, %v963, 0
    %v1023 = vsel %vm1006, %v964, 0
    %v1026 = vsel %vm1006, %v965, 0
    %v1029 = vsel %vm1006, %v966, 0
    %v1032 = vsel %vm1006, %v967, 0
    %v1035 = vsel %vm1006, %v968, 0
    %v1038 = vsel %vm1006, %v969, 0
    %v1041 = vsel %vm1006, %v970, 0
    %v1044 = vsel %vm1006, %v971, 0
    %v1047 = vsel %vm1006, %v972, 0
    %v1050 = vsel %vm1006, %v973, 0
    %v1053 = vsel %vm1006, %v974, 0
    %v1056 = vsel %vm1006, %v975, 0
    %v1059 = vsel %vm1006, %v976, 0
    %v1062 = vsel %vm1006, %v977, 0
    %v1065 = vsel %vm1006, %v978, 0
    %v1068 = vsel %vm1006, %v979, 0
    %v1071 = vsel %vm1006, %v980, 0
    %v1074 = vsel %vm1006, %v981, 0
    %v1077 = vsel %vm1006, %v982, 0
    %v1080 = vsel %vm1006, %v983, 0
    %v1083 = vsel %vm1006, %v984, 0
    %v1086 = vsel %vm1006, %v985, 0
    %v1089 = vsel %vm1006, %v986, 0
    %v1092 = vsel %vm1006, %v987, 0
    %v1095 = vsel %vm1006, %v988, 0
    %v1098 = vsel %vm1006, %v989, 0
    %v1101 = vsel %vm1006, %v990, 0
    %1103 = vmatprep.subr.mxu0 0.0
    %1104 = vmatpush1.msra.mxu0 %v991
    %1105 = vmatprep.subr.mxu0 0.0
    %1106 = vmatpush1.msra.mxu0 %v992
    %1107 = vmatprep.subr.mxu0 0.0
    %1108 = vmatpush1.msra.mxu0 %v993
    %1109 = vmatprep.subr.mxu0 0.0
    %1110 = vmatpush1.msra.mxu0 %v994
    %1111 = vmatprep.subr.mxu0 0.0
    %1112 = vmatpush1.msra.mxu0 %v995
    %1113 = vmatprep.subr.mxu0 0.0
    %1114 = vmatpush1.msra.mxu0 %v996
    %1115 = vmatprep.subr.mxu0 0.0
    %1116 = vmatpush1.msra.mxu0 %v997
    %1117 = vmatprep.subr.mxu0 0.0
    %1118 = vmatpush1.msra.mxu0 %v998
    %1119 = vmatprep.subr.mxu0 0.0
    %1120 = vmatpush1.msra.mxu0 0.0
    %1121 = vmatprep.subr.mxu0 0.0
    %1122 = vmatpush1.msra.mxu0 0.0
    %1123 = vmatprep.subr.mxu0 0.0
    %1124 = vmatpush1.msra.mxu0 0.0
    %1125 = vmatprep.subr.mxu0 0.0
    %1126 = vmatpush1.msra.mxu0 0.0
    %1127 = vmatprep.subr.mxu0 0.0
    %1128 = vmatpush1.msra.mxu0 0.0
    %1129 = vmatprep.subr.mxu0 0.0
    %1130 = vmatpush1.msra.mxu0 0.0
    %1131 = vmatprep.subr.mxu0 0.0
    %1132 = vmatpush1.msra.mxu0 0.0
    %1133 = vmatprep.subr.mxu0 0.0
    %1134 = vmatpush1.msra.mxu0 0.0
    %1135 = vmatprep.subr.mxu0 0.0
    %1136 = vmatpush1.msra.mxu0 0.0
    %1137 = vmatprep.subr.mxu0 0.0
    %1138 = vmatpush1.msra.mxu0 0.0
    %1139 = vmatprep.subr.mxu0 0.0
    %1140 = vmatpush1.msra.mxu0 0.0
    %1141 = vmatprep.subr.mxu0 0.0
    %1142 = vmatpush1.msra.mxu0 0.0
    %1143 = vmatprep.subr.mxu0 0.0
    %1144 = vmatpush1.msra.mxu0 0.0
    %1145 = vmatprep.subr.mxu0 0.0
    %1146 = vmatpush1.msra.mxu0 0.0
    %1147 = vmatprep.subr.mxu0 0.0
    %1148 = vmatpush1.msra.mxu0 0.0
    %1149 = vmatprep.subr.mxu0 0.0
    %1150 = vmatpush1.msra.mxu0 0.0
    %1151 = vmatprep.subr.mxu0 0.0
    %1152 = vmatpush1.msra.mxu0 0.0
    %1153 = vmatprep.subr.mxu0 0.0
    %1154 = vmatpush1.msra.mxu0 0.0
    %1155 = vmatprep.subr.mxu0 0.0
    %1156 = vmatpush1.msra.mxu0 0.0
    %1157 = vmatprep.subr.mxu0 0.0
    %1158 = vmatpush1.msra.mxu0 0.0
    %1159 = vmatprep.subr.mxu0 0.0
    %1160 = vmatpush1.msra.mxu0 0.0
    %1161 = vmatprep.subr.mxu0 0.0
    %1162 = vmatpush1.msra.mxu0 0.0
    %1163 = vmatprep.subr.mxu0 0.0
    %1164 = vmatpush1.msra.mxu0 0.0
    %1165 = vmatprep.subr.mxu0 0.0
    %1166 = vmatpush1.msra.mxu0 0.0
    %1167 = vmatprep.mubr.f32.mxu0 0.0
    %1168 = vmatmul.mubr.f32.gmra.mrb[0].mxu0 %v1008
    %v1169 = vpop.f32.mrb[0].mxu0
    %v1170 = vadd.f32 %v1004, %v1169
    %v1171 = vpop.f32.mrb[0].mxu0
    %1172 = vmatprep.mubr.f32.mxu0 0.0
    %1173 = vmatmul.mubr.f32.gmra.mrb[0].mxu0 %v1011
    %v1174 = vpop.f32.mrb[0].mxu0
    %v1175 = vadd.f32 %v1004, %v1174
    %v1176 = vpop.f32.mrb[0].mxu0
    %1177 = vmatprep.mubr.f32.mxu0 0.0
    %1178 = vmatmul.mubr.f32.gmra.mrb[0].mxu0 %v1014
    %v1179 = vpop.f32.mrb[0].mxu0
    %v1180 = vadd.f32 %v1004, %v1179
    %v1181 = vpop.f32.mrb[0].mxu0
    %1182 = vmatprep.mubr.f32.mxu0 0.0
    %1183 = vmatmul.mubr.f32.gmra.mrb[0].mxu0 %v1017
    %v1184 = vpop.f32.mrb[0].mxu0
    %v1185 = vadd.f32 %v1004, %v1184
    %v1186 = vpop.f32.mrb[0].mxu0
    %1187 = vmatprep.mubr.f32.mxu0 0.0
    %1188 = vmatmul.mubr.f32.gmra.mrb[0].mxu0 %v1020
    %v1189 = vpop.f32.mrb[0].mxu0
    %v1190 = vadd.f32 %v1004, %v1189
    %v1191 = vpop.f32.mrb[0].mxu0
    %1192 = vmatprep.mubr.f32.mxu0 0.0
    %1193 = vmatmul.mubr.f32.gmra.mrb[0].mxu0 %v1023
    %v1194 = vpop.f32.mrb[0].mxu0
    %v1195 = vadd.f32 %v1004, %v1194
    %v1196 = vpop.f32.mrb[0].mxu0
    %1197 = vmatprep.mubr.f32.mxu0 0.0
    %1198 = vmatmul.mubr.f32.gmra.mrb[0].mxu0 %v1026
    %v1199 = vpop.f32.mrb[0].mxu0
    %v1200 = vadd.f32 %v1004, %v1199
    %v1201 = vpop.f32.mrb[0].mxu0
    %1202 = vmatprep.mubr.f32.mxu0 0.0
    %1203 = vmatmul.mubr.f32.gmra.mrb[0].mxu0 %v1029
    %v1204 = vpop.f32.mrb[0].mxu0
    %v1205 = vadd.f32 %v1004, %v1204
    %v1206 = vpop.f32.mrb[0].mxu0
    %1207 = vmatprep.mubr.f32.mxu0 0.0
    %1208 = vmatmul.mubr.f32.gmra.mrb[0].mxu0 %v1032
    %v1209 = vpop.f32.mrb[0].mxu0
    %v1210 = vadd.f32 %v1004, %v1209
    %v1211 = vpop.f32.mrb[0].mxu0
    %1212 = vmatprep.mubr.f32.mxu0 0.0
    %1213 = vmatmul.mubr.f32.gmra.mrb[0].mxu0 %v1035
    %v1214 = vpop.f32.mrb[0].mxu0
    %v1215 = vadd.f32 %v1004, %v1214
    %v1216 = vpop.f32.mrb[0].mxu0
    %1217 = vmatprep.mubr.f32.mxu0 0.0
    %1218 = vmatmul.mubr.f32.gmra.mrb[0].mxu0 %v1038
    %v1219 = vpop.f32.mrb[0].mxu0
    %v1220 = vadd.f32 %v1004, %v1219
    %v1221 = vpop.f32.mrb[0].mxu0
    %1222 = vmatprep.mubr.f32.mxu0 0.0
    %1223 = vmatmul.mubr.f32.gmra.mrb[0].mxu0 %v1041
    %v1224 = vpop.f32.mrb[0].mxu0
    %v1225 = vadd.f32 %v1004, %v1224
    %v1226 = vpop.f32.mrb[0].mxu0
    %1227 = vmatprep.mubr.f32.mxu0 0.0
    %1228 = vmatmul.mubr.f32.gmra.mrb[0].mxu0 %v1044
    %v1229 = vpop.f32.mrb[0].mxu0
    %v1230 = vadd.f32 %v1004, %v1229
    %v1231 = vpop.f32.mrb[0].mxu0
    %1232 = vmatprep.mubr.f32.mxu0 0.0
    %1233 = vmatmul.mubr.f32.gmra.mrb[0].mxu0 %v1047
    %v1234 = vpop.f32.mrb[0].mxu0
    %v1235 = vadd.f32 %v1004, %v1234
    %v1236 = vpop.f32.mrb[0].mxu0
    %1237 = vmatprep.mubr.f32.mxu0 0.0
    %1238 = vmatmul.mubr.f32.gmra.mrb[0].mxu0 %v1050
    %v1239 = vpop.f32.mrb[0].mxu0
    %v1240 = vadd.f32 %v1004, %v1239
    %v1241 = vpop.f32.mrb[0].mxu0
    %1242 = vmatprep.mubr.f32.mxu0 0.0
    %1243 = vmatmul.mubr.f32.gmra.mrb[0].mxu0 %v1053
    %v1244 = vpop.f32.mrb[0].mxu0
    %v1245 = vadd.f32 %v1004, %v1244
    %v1246 = vpop.f32.mrb[0].mxu0
    %1247 = vmatprep.mubr.f32.mxu0 0.0
    %1248 = vmatmul.mubr.f32.gmra.mrb[0].mxu0 %v1056
    %v1249 = vpop.f32.mrb[0].mxu0
    %v1250 = vadd.f32 %v1004, %v1249
    %v1251 = vpop.f32.mrb[0].mxu0
    %1252 = vmatprep.mubr.f32.mxu0 0.0
    %1253 = vmatmul.mubr.f32.gmra.mrb[0].mxu0 %v1059
    %v1254 = vpop.f32.mrb[0].mxu0
    %v1255 = vadd.f32 %v1004, %v1254
    %v1256 = vpop.f32.mrb[0].mxu0
    %1257 = vmatprep.mubr.f32.mxu0 0.0
    %1258 = vmatmul.mubr.f32.gmra.mrb[0].mxu0 %v1062
    %v1259 = vpop.f32.mrb[0].mxu0
    %v1260 = vadd.f32 %v1004, %v1259
    %v1261 = vpop.f32.mrb[0].mxu0
    %1262 = vmatprep.mubr.f32.mxu0 0.0
    %1263 = vmatmul.mubr.f32.gmra.mrb[0].mxu0 %v1065
    %v1264 = vpop.f32.mrb[0].mxu0
    %v1265 = vadd.f32 %v1004, %v1264
    %v1266 = vpop.f32.mrb[0].mxu0
    %1267 = vmatprep.mubr.f32.mxu0 0.0
    %1268 = vmatmul.mubr.f32.gmra.mrb[0].mxu0 %v1068
    %v1269 = vpop.f32.mrb[0].mxu0
    %v1270 = vadd.f32 %v1004, %v1269
    %v1271 = vpop.f32.mrb[0].mxu0
    %1272 = vmatprep.mubr.f32.mxu0 0.0
    %1273 = vmatmul.mubr.f32.gmra.mrb[0].mxu0 %v1071
    %v1274 = vpop.f32.mrb[0].mxu0
    %v1275 = vadd.f32 %v1004, %v1274
    %v1276 = vpop.f32.mrb[0].mxu0
    %1277 = vmatprep.mubr.f32.mxu0 0.0
    %1278 = vmatmul.mubr.f32.gmra.mrb[0].mxu0 %v1074
    %v1279 = vpop.f32.mrb[0].mxu0
    %v1280 = vadd.f32 %v1004, %v1279
    %v1281 = vpop.f32.mrb[0].mxu0
    %1282 = vmatprep.mubr.f32.mxu0 0.0
    %1283 = vmatmul.mubr.f32.gmra.mrb[0].mxu0 %v1077
    %v1284 = vpop.f32.mrb[0].mxu0
    %v1285 = vadd.f32 %v1004, %v1284
    %v1286 = vpop.f32.mrb[0].mxu0
    %1287 = vmatprep.mubr.f32.mxu0 0.0
    %1288 = vmatmul.mubr.f32.gmra.mrb[0].mxu0 %v1080
    %v1289 = vpop.f32.mrb[0].mxu0
    %v1290 = vadd.f32 %v1004, %v1289
    %v1291 = vpop.f32.mrb[0].mxu0
    %1292 = vmatprep.mubr.f32.mxu0 0.0
    %1293 = vmatmul.mubr.f32.gmra.mrb[0].mxu0 %v1083
    %v1294 = vpop.f32.mrb[0].mxu0
    %v1295 = vadd.f32 %v1004, %v1294
    %v1296 = vpop.f32.mrb[0].mxu0
    %1297 = vmatprep.mubr.f32.mxu0 0.0
    %1298 = vmatmul.mubr.f32.gmra.mrb[0].mxu0 %v1086
    %v1299 = vpop.f32.mrb[0].mxu0
    %v1300 = vadd.f32 %v1004, %v1299
    %v1301 = vpop.f32.mrb[0].mxu0
    %1302 = vmatprep.mubr.f32.mxu0 0.0
    %1303 = vmatmul.mubr.f32.gmra.mrb[0].mxu0 %v1089
    %v1304 = vpop.f32.mrb[0].mxu0
    %v1305 = vadd.f32 %v1004, %v1304
    %v1306 = vpop.f32.mrb[0].mxu0
    %1307 = vmatprep.mubr.f32.mxu0 0.0
    %1308 = vmatmul.mubr.f32.gmra.mrb[0].mxu0 %v1092
    %v1309 = vpop.f32.mrb[0].mxu0
    %v1310 = vadd.f32 %v1004, %v1309
    %v1311 = vpop.f32.mrb[0].mxu0
    %1312 = vmatprep.mubr.f32.mxu0 0.0
    %1313 = vmatmul.mubr.f32.gmra.mrb[0].mxu0 %v1095
    %v1314 = vpop.f32.mrb[0].mxu0
    %v1315 = vadd.f32 %v1004, %v1314
    %v1316 = vpop.f32.mrb[0].mxu0
    %1317 = vmatprep.mubr.f32.mxu0 0.0
    %1318 = vmatmul.mubr.f32.gmra.mrb[0].mxu0 %v1098
    %v1319 = vpop.f32.mrb[0].mxu0
    %v1320 = vadd.f32 %v1004, %v1319
    %v1321 = vpop.f32.mrb[0].mxu0
    %1322 = vmatprep.mubr.f32.mxu0 0.0
    %1323 = vmatmul.mubr.f32.gmra.mrb[0].mxu0 %v1101
    %v1324 = vpop.f32.mrb[0].mxu0
    %v1325 = vadd.f32 %v1004, %v1324
    %v1326 = vpop.f32.mrb[0].mxu0
    %1327 = vdwg.mxu0
    %v1328 = vmax.f32 %v1170, 0.0
    %v1329 = vmax.f32 %v1175, 0.0
    %v1330 = vmax.f32 %v1180, 0.0
    %v1331 = vmax.f32 %v1185, 0.0
    %v1332 = vmax.f32 %v1190, 0.0
    %v1333 = vmax.f32 %v1195, 0.0
    %v1334 = vmax.f32 %v1200, 0.0
    %v1335 = vmax.f32 %v1205, 0.0
    %v1336 = vmax.f32 %v1210, 0.0
    %v1337 = vmax.f32 %v1215, 0.0
    %v1338 = vmax.f32 %v1220, 0.0
    %v1339 = vmax.f32 %v1225, 0.0
    %v1340 = vmax.f32 %v1230, 0.0
    %v1341 = vmax.f32 %v1235, 0.0
    %v1342 = vmax.f32 %v1240, 0.0
    %v1343 = vmax.f32 %v1245, 0.0
    %v1344 = vmax.f32 %v1250, 0.0
    %v1345 = vmax.f32 %v1255, 0.0
    %v1346 = vmax.f32 %v1260, 0.0
    %v1347 = vmax.f32 %v1265, 0.0
    %v1348 = vmax.f32 %v1270, 0.0
    %v1349 = vmax.f32 %v1275, 0.0
    %v1350 = vmax.f32 %v1280, 0.0
    %v1351 = vmax.f32 %v1285, 0.0
    %v1352 = vmax.f32 %v1290, 0.0
    %v1353 = vmax.f32 %v1295, 0.0
    %v1354 = vmax.f32 %v1300, 0.0
    %v1355 = vmax.f32 %v1305, 0.0
    %v1356 = vmax.f32 %v1310, 0.0
    %v1357 = vmax.f32 %v1315, 0.0
    %v1358 = vmax.f32 %v1320, 0.0
    %v1359 = vmax.f32 %v1325, 0.0
    %v1360 = vld [vmem:[%s7] sm:$0x1]
    %s1361 = sld [smem:[#allocation2]]
    %v1362 = vstv %s1361
    %v1364 = vsel %vm1006, %v1360, 0
    %v1367 = vsel %vm1006, %v1328, 0
    %v1370 = vsel %vm1006, %v1329, 0
    %v1373 = vsel %vm1006, %v1330, 0
    %v1376 = vsel %vm1006, %v1331, 0
    %v1379 = vsel %vm1006, %v1332, 0
    %v1382 = vsel %vm1006, %v1333, 0
    %v1385 = vsel %vm1006, %v1334, 0
    %v1388 = vsel %vm1006, %v1335, 0
    %v1391 = vsel %vm1006, %v1336, 0
    %v1394 = vsel %vm1006, %v1337, 0
    %v1397 = vsel %vm1006, %v1338, 0
    %v1400 = vsel %vm1006, %v1339, 0
    %v1403 = vsel %vm1006, %v1340, 0
    %v1406 = vsel %vm1006, %v1341, 0
    %v1409 = vsel %vm1006, %v1342, 0
    %v1412 = vsel %vm1006, %v1343, 0
    %v1415 = vsel %vm1006, %v1344, 0
    %v1418 = vsel %vm1006, %v1345, 0
    %v1421 = vsel %vm1006, %v1346, 0
    %v1424 = vsel %vm1006, %v1347, 0
    %v1427 = vsel %vm1006, %v1348, 0
    %v1430 = vsel %vm1006, %v1349, 0
    %v1433 = vsel %vm1006, %v1350, 0
    %v1436 = vsel %vm1006, %v1351, 0
    %v1439 = vsel %vm1006, %v1352, 0
    %v1442 = vsel %vm1006, %v1353, 0
    %v1445 = vsel %vm1006, %v1354, 0
    %v1448 = vsel %vm1006, %v1355, 0
    %v1451 = vsel %vm1006, %v1356, 0
    %v1454 = vsel %vm1006, %v1357, 0
    %v1457 = vsel %vm1006, %v1358, 0
    %v1460 = vsel %vm1006, %v1359, 0
    %1462 = vmatprep.subr.mxu0 0.0
    %1463 = vmatpush1.xpose.msra.mxu0 %v1367
    %1464 = vmatprep.subr.mxu0 0.0
    %1465 = vmatpush1.xpose.msra.mxu0 %v1370
    %1466 = vmatprep.subr.mxu0 0.0
    %1467 = vmatpush1.xpose.msra.mxu0 %v1373
    %1468 = vmatprep.subr.mxu0 0.0
    %1469 = vmatpush1.xpose.msra.mxu0 %v1376
    %1470 = vmatprep.subr.mxu0 0.0
    %1471 = vmatpush1.xpose.msra.mxu0 %v1379
    %1472 = vmatprep.subr.mxu0 0.0
    %1473 = vmatpush1.xpose.msra.mxu0 %v1382
    %1474 = vmatprep.subr.mxu0 0.0
    %1475 = vmatpush1.xpose.msra.mxu0 %v1385
    %1476 = vmatprep.subr.mxu0 0.0
    %1477 = vmatpush1.xpose.msra.mxu0 %v1388
    %1478 = vmatprep.subr.mxu0 0.0
    %1479 = vmatpush1.xpose.msra.mxu0 %v1391
    %1480 = vmatprep.subr.mxu0 0.0
    %1481 = vmatpush1.xpose.msra.mxu0 %v1394
    %1482 = vmatprep.subr.mxu0 0.0
    %1483 = vmatpush1.xpose.msra.mxu0 %v1397
    %1484 = vmatprep.subr.mxu0 0.0
    %1485 = vmatpush1.xpose.msra.mxu0 %v1400
    %1486 = vmatprep.subr.mxu0 0.0
    %1487 = vmatpush1.xpose.msra.mxu0 %v1403
    %1488 = vmatprep.subr.mxu0 0.0
    %1489 = vmatpush1.xpose.msra.mxu0 %v1406
    %1490 = vmatprep.subr.mxu0 0.0
    %1491 = vmatpush1.xpose.msra.mxu0 %v1409
    %1492 = vmatprep.subr.mxu0 0.0
    %1493 = vmatpush1.xpose.msra.mxu0 %v1412
    %1494 = vmatprep.subr.mxu0 0.0
    %1495 = vmatpush1.xpose.msra.mxu0 %v1415
    %1496 = vmatprep.subr.mxu0 0.0
    %1497 = vmatpush1.xpose.msra.mxu0 %v1418
    %1498 = vmatprep.subr.mxu0 0.0
    %1499 = vmatpush1.xpose.msra.mxu0 %v1421
    %1500 = vmatprep.subr.mxu0 0.0
    %1501 = vmatpush1.xpose.msra.mxu0 %v1424
    %1502 = vmatprep.subr.mxu0 0.0
    %1503 = vmatpush1.xpose.msra.mxu0 %v1427
    %1504 = vmatprep.subr.mxu0 0.0
    %1505 = vmatpush1.xpose.msra.mxu0 %v1430
    %1506 = vmatprep.subr.mxu0 0.0
    %1507 = vmatpush1.xpose.msra.mxu0 %v1433
    %1508 = vmatprep.subr.mxu0 0.0
    %1509 = vmatpush1.xpose.msra.mxu0 %v1436
    %1510 = vmatprep.subr.mxu0 0.0
    %1511 = vmatpush1.xpose.msra.mxu0 %v1439
    %1512 = vmatprep.subr.mxu0 0.0
    %1513 = vmatpush1.xpose.msra.mxu0 %v1442
    %1514 = vmatprep.subr.mxu0 0.0
    %1515 = vmatpush1.xpose.msra.mxu0 %v1445
    %1516 = vmatprep.subr.mxu0 0.0
    %1517 = vmatpush1.xpose.msra.mxu0 %v1448
    %1518 = vmatprep.subr.mxu0 0.0
    %1519 = vmatpush1.xpose.msra.mxu0 %v1451
    %1520 = vmatprep.subr.mxu0 0.0
    %1521 = vmatpush1.xpose.msra.mxu0 %v1454
    %1522 = vmatprep.subr.mxu0 0.0
    %1523 = vmatpush1.xpose.msra.mxu0 %v1457
    %1524 = vmatprep.subr.mxu0 0.0
    %1525 = vmatpush1.xpose.msra.mxu0 %v1460
    %1526 = vmatprep.mubr.f32.mxu0 0.0
    %1527 = vmatmul.mubr.f32.gmra.mrb[0].mxu0 %v1364
    %v1528 = vpop.f32.mrb[0].mxu0
    %v1529 = vadd.f32 %v1362, %v1528
    %v1530 = vpop.f32.mrb[0].mxu0
    %v1531 = vadd.f32 %v1362, %v1530
    %1532 = vdwg.mxu0
    %v1535 = vcombine.low %v1529, %v1531
    %v1537 = vunpack.c.l.s4 1966171168
    %v1538 = vunpack.c.0.s8 %v1537
    %v1539 = vlaneseq
    %v1540 = vshrl.u32 %v1539, 7
    %v1541 = vsub.s32 %v1538, %v1540
    %v1542 = vrot.slane %v1535, %v1541
    %v1544 = vunpack.c.l.s4 1966171168
    %v1545 = vunpack.c.0.s8 %v1544
    %v1546 = vlaneseq
    %v1547 = vshrl.u32 %v1546, 7
    %v1548 = vsub.s32 %v1545, %v1547
    %v1549 = vrot.slane %v1542, %v1548
    %v1551 = vlaneseq
    %vm1552 = vcmp.ge.s32.totalorder %v1551, 0
    %vm1553 = vcmp.lt.s32.totalorder %v1551, 256
    %vm1554 = vmand %vm1552, %vm1553
    %1555 = vst.msk [vmem:[#allocation3] sm:$0x3] %vm1554, %v1549
    // Predicated region
    $region38: #{tpu_custom_call.1} parent=1 // pred_check
      _
    $region39: #{tpu_custom_call.1} parent=1 // pred_check_branch
      %1557 = sbr.rel (0) target = $region41
    $region40: #{tpu_custom_call.1} parent=1 // pred_region
      %s1559 = ssub.s32 32, 32
      %1560 = vsyncadd [#allocation4], %s1559
      %s1562 = sshll.u32 [#allocation3], 4
      %s1563 = int_to_ptr.vmem [resolvable:$true] %s1562
      %1565 = dma.vmem_to_hbm [thread:$0]  %s1563, 32, %s9, [#allocation4]
    $region41: #{tpu_custom_call.1} parent=1 // pred_fallthru
      _
    // Predicated region
    $region42: #{tpu_custom_call.1} parent=1 // pred_check
      _
    $region43: #{tpu_custom_call.1} parent=1 // pred_check_branch
      %1567 = sbr.rel (0) target = $region45
    $region44: #{tpu_custom_call.1} parent=1 // pred_region
      %1568 = dma.done [#allocation4], 32
    $region45: #{tpu_custom_call.1} parent=1 // pred_fallthru
      _
    %1569 = vsyncpa [#allocation4], 1

</llo_original>
